<compile_context>
chip_gen: v7x
topology: tpu7x:2x2x1
jax: 0.10.0
libtpu: 0.0.40
codegen_flags: <defaults>
</compile_context>

<pallas_src>
import functools

import jax
import jax.numpy as jnp
from jax.experimental import pallas as pl
from jax.experimental.pallas import tpu as pltpu


def _round_up(v: int, m: int) -> int:
    return ((v + m - 1) // m) * m


def _linear_kernel(x_ref, w_ref, b_ref, o_ref, acc_ref):
    # x_ref: (TM, TK) bf16 | w_ref: (TK, TN) bf16 | b_ref: (1, TN) f32
    # o_ref: (TM, TN)      | acc_ref: (TM, TN) f32 scratch (resident over K)
    k = pl.program_id(2)

    @pl.when(k == 0)
    def _init():
        acc_ref[...] = jnp.zeros_like(acc_ref)

    # Pure MXU inner loop: bf16 inputs, f32 accumulation.
    acc_ref[...] += jnp.dot(
        x_ref[...], w_ref[...], preferred_element_type=jnp.float32
    )

    @pl.when(k == pl.num_programs(2) - 1)
    def _finalize():
        # Bias added exactly once, in f32, then cast to the output dtype.
        o_ref[...] = (acc_ref[...] + b_ref[...]).astype(o_ref.dtype)


@functools.partial(jax.jit, static_argnames=("tm", "tn", "tk", "compute_dtype"))
def linear_forward(x, w, b, *, tm=256, tn=256, tk=512,
                   compute_dtype=jnp.bfloat16):
    """y = x @ w.T + b  (PyTorch nn.Linear forward) as a tiled Pallas kernel."""
    batch, in_dim = x.shape
    out_dim, in_dim_w = w.shape
    assert in_dim == in_dim_w
    assert b.shape == (out_dim,)
    out_dtype = x.dtype

    # Pre-transpose weight once in XLA: (in_dim, out_dim) -> K on sublanes,
    # N (output features) on lanes.
    w_t = w.T

    # Adaptive, hardware-aligned tiles (sublane=8, lane=128).
    tm = min(tm, _round_up(batch, 8))
    tk = min(tk, _round_up(in_dim, 128))
    tn = min(tn, _round_up(out_dim, 128))

    m_pad = _round_up(batch, tm)
    k_pad = _round_up(in_dim, tk)
    n_pad = _round_up(out_dim, tn)

    # Zero-pad (zeros in K contribute nothing to the dot product).
    x_p = jnp.zeros((m_pad, k_pad), compute_dtype).at[:batch, :in_dim].set(
        x.astype(compute_dtype))
    w_p = jnp.zeros((k_pad, n_pad), compute_dtype).at[:in_dim, :out_dim].set(
        w_t.astype(compute_dtype))
    b_p = jnp.zeros((1, n_pad), jnp.float32).at[0, :out_dim].set(
        b.astype(jnp.float32))

    grid = (m_pad // tm, n_pad // tn, k_pad // tk)

    y_p = pl.pallas_call(
        _linear_kernel,
        out_shape=jax.ShapeDtypeStruct((m_pad, n_pad), out_dtype),
        grid=grid,
        in_specs=[
            pl.BlockSpec((tm, tk), lambda i, j, k: (i, k)),   # x tile
            pl.BlockSpec((tk, tn), lambda i, j, k: (k, j)),   # w.T tile
            pl.BlockSpec((1, tn), lambda i, j, k: (0, j)),    # bias tile (K-invariant)
        ],
        out_specs=pl.BlockSpec((tm, tn), lambda i, j, k: (i, j)),
        scratch_shapes=[pltpu.VMEM((tm, tn), jnp.float32)],
        compiler_params=pltpu.CompilerParams(
            dimension_semantics=("parallel", "parallel", "arbitrary"),
        ),
    )(x_p, w_p, b_p)

    return y_p[:batch, :out_dim]


if __name__ == "__main__":
    # Small shapes consistent with nn.Linear(input_dim, output_dim).
    batch, input_dim, output_dim = 8, 32, 16

    key = jax.random.PRNGKey(0)
    kx, kw, kb = jax.random.split(key, 3)

    x = jax.random.normal(kx, (batch, input_dim), dtype=jnp.float32)
    # Deterministic parameter init (mimics nn.Linear's uniform init bounds).
    bound = 1.0 / (input_dim ** 0.5)
    w = jax.random.uniform(kw, (output_dim, input_dim), jnp.float32, -bound, bound)
    b = jax.random.uniform(kb, (output_dim,), jnp.float32, -bound, bound)

    y = linear_forward(x, w, b)
    jax.block_until_ready(y)

    # Correctness check against plain-JAX f32 reference (loose tolerance
    # because the MXU path uses bf16 inputs with f32 accumulation).
    y_ref = x @ w.T + b
    assert y.shape == (batch, output_dim)
    assert y.dtype == x.dtype
    assert jnp.allclose(y, y_ref, atol=5e-2, rtol=5e-2), (
        float(jnp.max(jnp.abs(y - y_ref))))

    print("KERNEL_OK")
</pallas_src>

<mosaic_0001>
module attributes {stable_mosaic.version = 11 : i64} {
  func.func @_linear_kernel(%arg0: i32, %arg1: i32, %arg2: i32, %arg3: memref<8x128xbf16, #tpu.memory_space<vmem>>, %arg4: memref<128x128xbf16, #tpu.memory_space<vmem>>, %arg5: memref<1x128xf32, #tpu.memory_space<vmem>>, %arg6: memref<8x128xf32, #tpu.memory_space<vmem>>, %arg7: memref<8x128xf32, #tpu.memory_space<vmem>>) attributes {dimension_semantics = [#tpu.dimension_semantics<parallel>, #tpu.dimension_semantics<parallel>, #tpu.dimension_semantics<arbitrary>], iteration_bounds = array<i64: 1, 1, 1>, scalar_prefetch = 0 : i64, scratch_operands = 1 : i64, tpu.core_type = #tpu.core_type<tc>, window_params = [{transform_indices = @transform_0, window_bounds = array<i64: 8, 128>}, {transform_indices = @transform_1, window_bounds = array<i64: 128, 128>}, {transform_indices = @transform_2, window_bounds = array<i64: 1, 128>}, {transform_indices = @transform_3, window_bounds = array<i64: 8, 128>}]} {
    %c0_i32 = arith.constant 0 : i32
    %0 = arith.cmpi eq, %arg2, %c0_i32 : i32
    %1 = arith.extui %0 : i1 to i32
    %c0_i32_0 = arith.constant 0 : i32
    %2 = arith.cmpi ne, %1, %c0_i32_0 : i32
    scf.if %2 {
      %cst_10 = arith.constant 0.000000e+00 : f32
      %12 = vector.broadcast %cst_10 : f32 to vector<8x128xf32>
      %c0_11 = arith.constant 0 : index
      %c0_12 = arith.constant 0 : index
      %13 = vector.load %arg7[%c0_11, %c0_12] : memref<8x128xf32, #tpu.memory_space<vmem>>, vector<8x128xf32>
      tpu.vector_store %arg7[%c0_11, %c0_12], %12 {strides = array<i32>} : memref<8x128xf32, #tpu.memory_space<vmem>>, vector<8x128xf32>,
    } else {
    }
    %c0 = arith.constant 0 : index
    %c0_1 = arith.constant 0 : index
    %3 = vector.load %arg7[%c0, %c0_1] : memref<8x128xf32, #tpu.memory_space<vmem>>, vector<8x128xf32>
    %c0_2 = arith.constant 0 : index
    %c0_3 = arith.constant 0 : index
    %4 = vector.load %arg3[%c0_2, %c0_3] : memref<8x128xbf16, #tpu.memory_space<vmem>>, vector<8x128xbf16>
    %c0_4 = arith.constant 0 : index
    %c0_5 = arith.constant 0 : index
    %5 = vector.load %arg4[%c0_4, %c0_5] : memref<128x128xbf16, #tpu.memory_space<vmem>>, vector<128x128xbf16>
    %cst = arith.constant dense<0.000000e+00> : vector<8x128xf32>
    %6 = tpu.matmul %4, %5, %cst {dimension_numbers = #tpu.dot_dimension_numbers<[1], [0], [0], [1], [0, 0, 1, 1], [], []>} : vector<8x128xbf16>, vector<128x128xbf16>, vector<8x128xf32> -> vector<8x128xf32>
    %7 = arith.addf %3, %6 : vector<8x128xf32>
    %c0_6 = arith.constant 0 : index
    %c0_7 = arith.constant 0 : index
    %8 = vector.load %arg7[%c0_6, %c0_7] : memref<8x128xf32, #tpu.memory_space<vmem>>, vector<8x128xf32>
    tpu.vector_store %arg7[%c0_6, %c0_7], %7 {strides = array<i32>} : memref<8x128xf32, #tpu.memory_space<vmem>>, vector<8x128xf32>,
    %c0_i32_8 = arith.constant 0 : i32
    %9 = arith.cmpi eq, %arg2, %c0_i32_8 : i32
    %10 = arith.extui %9 : i1 to i32
    %c0_i32_9 = arith.constant 0 : i32
    %11 = arith.cmpi ne, %10, %c0_i32_9 : i32
    scf.if %11 {
      %c0_10 = arith.constant 0 : index
      %c0_11 = arith.constant 0 : index
      %12 = vector.load %arg7[%c0_10, %c0_11] : memref<8x128xf32, #tpu.memory_space<vmem>>, vector<8x128xf32>
      %c0_12 = arith.constant 0 : index
      %c0_13 = arith.constant 0 : index
      %13 = vector.load %arg5[%c0_12, %c0_13] : memref<1x128xf32, #tpu.memory_space<vmem>>, vector<1x128xf32>
      %14 = vector.broadcast %13 : vector<1x128xf32> to vector<8x128xf32>
      %15 = arith.addf %12, %14 : vector<8x128xf32>
      %c0_14 = arith.constant 0 : index
      %c0_15 = arith.constant 0 : index
      %16 = vector.load %arg6[%c0_14, %c0_15] : memref<8x128xf32, #tpu.memory_space<vmem>>, vector<8x128xf32>
      tpu.vector_store %arg6[%c0_14, %c0_15], %15 {strides = array<i32>} : memref<8x128xf32, #tpu.memory_space<vmem>>, vector<8x128xf32>,
    } else {
    }
    return
  }
  func.func @transform_0(%arg0: i32, %arg1: i32, %arg2: i32) -> (i32, i32) {
    %c0_i32 = arith.constant 0 : i32
    return %arg0, %arg2 : i32, i32
  }
  func.func @transform_1(%arg0: i32, %arg1: i32, %arg2: i32) -> (i32, i32) {
    %c0_i32 = arith.constant 0 : i32
    return %arg2, %arg1 : i32, i32
  }
  func.func @transform_2(%arg0: i32, %arg1: i32, %arg2: i32) -> (i32, i32) {
    %c0_i32 = arith.constant 0 : i32
    %c0_i32_0 = arith.constant 0 : i32
    return %c0_i32, %arg1 : i32, i32
  }
  func.func @transform_3(%arg0: i32, %arg1: i32, %arg2: i32) -> (i32, i32) {
    %c0_i32 = arith.constant 0 : i32
    return %arg0, %arg1 : i32, i32
  }
}

</mosaic_0001>

<llo_original>
// kernel: linear_forward.1
$region0: #{linear_forward.1}
  #allocation0 [shape = 'u32[]', space=smem, size = 0x4, offset = 0x4, fixed_abs, tag = 'smem constant byte address 0x4 - core index']
  #allocation1 [shape = 'u32[144,128]{1,0:T(1,128)}', space=vmem, size = 0x12000, scoped, tag = 'internal scratch']
  #allocation2 [shape = 'f32[8,128]{1,0:T(8,128)}', space=vmem, size = 0x1000, scoped, tag = 'scratch operand']
  %s0 = inlined_call_operand.vmem [shape: bf16[8,128], index: 0, kind: input, shape index: {}]
  %s1 = inlined_call_operand.vmem [shape: bf16[128,128], index: 1, kind: input, shape index: {}]
  %s2 = inlined_call_operand.vmem [shape: f32[1,128], index: 2, kind: input, shape index: {}]
  %s3 = inlined_call_operand.hbm [shape: f32[8,128], index: 3, kind: output, shape index: {}]
  %s4 = sld [smem:[#allocation0]]
  $region30: #{linear_forward.1} parent=0
    _
  %s6 = ssub.s32 1, %s4
  %s7 = scalar_select 0, %s6, %s4
  $region1: #{linear_forward.1} parent=0
    #allocation3 [shape = 'u8[4096]{0}', space=vmem, size = 0x1000, scoped, tag = 'output window, operand 0, single buffered']
    #allocation4 [shape = 's32[1]{0}', space=sflag, size = 0x4, scoped, tag = 'scoped memory for linear_forward.1']
    %8 = vsyncpa [#allocation4], 0
    // Predicated region
    $region2: #{linear_forward.1} parent=1 // pred_check
      _
    $region3: #{linear_forward.1} parent=1 // pred_check_branch
      %10 = sbr.rel (0) target = $region5
    $region4: #{linear_forward.1} parent=1 // pred_region
      _
    $region5: #{linear_forward.1} parent=1 // pred_fallthru
      _
    // Predicated region
    $region6: #{linear_forward.1} parent=1 // pred_check
      _
    $region7: #{linear_forward.1} parent=1 // pred_check_branch
      %12 = sbr.rel (0) target = $region9
    $region8: #{linear_forward.1} parent=1 // pred_region
      _
    $region9: #{linear_forward.1} parent=1 // pred_fallthru
      _
    // Predicated region
    $region10: #{linear_forward.1} parent=1 // pred_check
      _
    $region11: #{linear_forward.1} parent=1 // pred_check_branch
      %14 = sbr.rel (0) target = $region13
    $region12: #{linear_forward.1} parent=1 // pred_region
      _
    $region13: #{linear_forward.1} parent=1 // pred_fallthru
      _
    %p16 = scmp.eq.s32.totalorder 0, 0
    // Predicated region
    $region14: #{linear_forward.1} parent=1 // pred_check
      %p17 = pneg %p16
    $region15: #{linear_forward.1} parent=1 // pred_check_branch
      %19 = sbr.rel (%p17) target = $region17
    $region16: #{linear_forward.1} parent=1 // pred_region
      %20 = vst [vmem:[#allocation2] sm:$0xff] 0.0
    $region17: #{linear_forward.1} parent=1 // pred_fallthru
      _
    %v21 = vld [vmem:[#allocation2] sm:$0xff]
    %v22 = vld [vmem:[%s0] sm:$0xf]
    %v23 = vld [vmem:[%s1] sm:$0xf]
    %v24 = vld [vmem:[%s1 + $0x4] sm:$0xf]
    %v25 = vld [vmem:[%s1 + $0x8] sm:$0xf]
    %v26 = vld [vmem:[%s1 + $0xc] sm:$0xf]
    %v27 = vld [vmem:[%s1 + $0x10] sm:$0xf]
    %v28 = vld [vmem:[%s1 + $0x14] sm:$0xf]
    %v29 = vld [vmem:[%s1 + $0x18] sm:$0xf]
    %v30 = vld [vmem:[%s1 + $0x1c] sm:$0xf]
    %v31 = vld [vmem:[%s1 + $0x20] sm:$0xf]
    %v32 = vld [vmem:[%s1 + $0x24] sm:$0xf]
    %v33 = vld [vmem:[%s1 + $0x28] sm:$0xf]
    %v34 = vld [vmem:[%s1 + $0x2c] sm:$0xf]
    %v35 = vld [vmem:[%s1 + $0x30] sm:$0xf]
    %v36 = vld [vmem:[%s1 + $0x34] sm:$0xf]
    %v37 = vld [vmem:[%s1 + $0x38] sm:$0xf]
    %v38 = vld [vmem:[%s1 + $0x3c] sm:$0xf]
    %v55 = vunpack.c.l.b16 %v23
    %v56 = vunpack.c.l.b16 %v24
    %v57 = vunpack.c.l.b16 %v25
    %v58 = vunpack.c.l.b16 %v26
    %v59 = vunpack.c.l.b16 %v27
    %v60 = vunpack.c.l.b16 %v28
    %v61 = vunpack.c.l.b16 %v29
    %v62 = vunpack.c.l.b16 %v30
    %v63 = vunpack.c.l.b16 %v31
    %v64 = vunpack.c.l.b16 %v32
    %v65 = vunpack.c.l.b16 %v33
    %v66 = vunpack.c.l.b16 %v34
    %v67 = vunpack.c.l.b16 %v35
    %v68 = vunpack.c.l.b16 %v36
    %v69 = vunpack.c.l.b16 %v37
    %v70 = vunpack.c.l.b16 %v38
    %v71 = vpack.c.b16 %v56, %v55
    %v72 = vpack.c.b16 %v58, %v57
    %v73 = vpack.c.b16 %v60, %v59
    %v74 = vpack.c.b16 %v62, %v61
    %v75 = vpack.c.b16 %v64, %v63
    %v76 = vpack.c.b16 %v66, %v65
    %v77 = vpack.c.b16 %v68, %v67
    %v78 = vpack.c.b16 %v70, %v69
    %87 = vmatprep.subr.bf16.mxu0 0
    %88 = vmatpush1.bf16.msra.mxu0 %v71
    %89 = vmatprep.subr.bf16.mxu0 0
    %90 = vmatpush1.bf16.msra.mxu0 %v72
    %91 = vmatprep.subr.bf16.mxu0 0
    %92 = vmatpush1.bf16.msra.mxu0 %v73
    %93 = vmatprep.subr.bf16.mxu0 0
    %94 = vmatpush1.bf16.msra.mxu0 %v74
    %95 = vmatprep.subr.bf16.mxu0 0
    %96 = vmatpush1.bf16.msra.mxu0 %v75
    %97 = vmatprep.subr.bf16.mxu0 0
    %98 = vmatpush1.bf16.msra.mxu0 %v76
    %99 = vmatprep.subr.bf16.mxu0 0
    %100 = vmatpush1.bf16.msra.mxu0 %v77
    %101 = vmatprep.subr.bf16.mxu0 0
    %102 = vmatpush1.bf16.msra.mxu0 %v78
    %103 = vmatprep.subr.bf16.mxu0 0
    %104 = vmatpush1.bf16.msra.mxu0 0
    %105 = vmatprep.subr.bf16.mxu0 0
    %106 = vmatpush1.bf16.msra.mxu0 0
    %107 = vmatprep.subr.bf16.mxu0 0
    %108 = vmatpush1.bf16.msra.mxu0 0
    %109 = vmatprep.subr.bf16.mxu0 0
    %110 = vmatpush1.bf16.msra.mxu0 0
    %111 = vmatprep.subr.bf16.mxu0 0
    %112 = vmatpush1.bf16.msra.mxu0 0
    %113 = vmatprep.subr.bf16.mxu0 0
    %114 = vmatpush1.bf16.msra.mxu0 0
    %115 = vmatprep.subr.bf16.mxu0 0
    %116 = vmatpush1.bf16.msra.mxu0 0
    %117 = vmatprep.subr.bf16.mxu0 0
    %118 = vmatpush1.bf16.msra.mxu0 0
    %119 = vmatprep.mubr.bf16.mxu0 0
    %120 = vmatmul.mubr.bf16.gmra.mrb[0].mxu0 %v22
    %v121 = vpop.f32.mrb[0].mxu0
    %v122 = vadd.f32 0.0, %v121
    %v123 = vpop.f32.mrb[0].mxu0
    %v124 = vpop.f32.mrb[0].mxu0
    %v125 = vpop.f32.mrb[0].mxu0
    %126 = vdwg.mxu0
    %v127 = vadd.f32 %v21, %v122
    %128 = vst [vmem:[#allocation2] sm:$0xff] %v127
    // Predicated region
    $region18: #{linear_forward.1} parent=1 // pred_check
      %p129 = pneg %p16
    $region19: #{linear_forward.1} parent=1 // pred_check_branch
      %131 = sbr.rel (%p129) target = $region21
    $region20: #{linear_forward.1} parent=1 // pred_region
      %v132 = vld [vmem:[#allocation2] sm:$0xff]
      %v133 = vld [vmem:[%s2] sm:$0x1]
      %v135 = vlaneseq
      %v136 = vshrl.u32 %v135, 7
      %v137 = vsub.s32 0, %v136
      %v138 = vrot.slane %v133, %v137
      %v140 = vadd.f32 %v132, %v138
      %141 = vst [vmem:[#allocation3] sm:$0xff] %v140
    $region21: #{linear_forward.1} parent=1 // pred_fallthru
      _
    // Predicated region
    $region22: #{linear_forward.1} parent=1 // pred_check
      _
    $region23: #{linear_forward.1} parent=1 // pred_check_branch
      %143 = sbr.rel (0) target = $region25
    $region24: #{linear_forward.1} parent=1 // pred_region
      %s145 = ssub.s32 128, 128
      %146 = vsyncadd [#allocation4], %s145
      %s148 = sshll.u32 [#allocation3], 4
      %s149 = int_to_ptr.vmem [resolvable:$true] %s148
      %151 = dma.vmem_to_hbm [thread:$0]  %s149, 128, %s3, [#allocation4]
    $region25: #{linear_forward.1} parent=1 // pred_fallthru
      _
    // Predicated region
    $region26: #{linear_forward.1} parent=1 // pred_check
      _
    $region27: #{linear_forward.1} parent=1 // pred_check_branch
      %153 = sbr.rel (0) target = $region29
    $region28: #{linear_forward.1} parent=1 // pred_region
      %154 = dma.done [#allocation4], 128
    $region29: #{linear_forward.1} parent=1 // pred_fallthru
      _
    %155 = vsyncpa [#allocation4], 1

</llo_original>
